<compile_context>
chip_gen: v5e
topology: v5e:2x2
jax: 0.10.0
libtpu: 0.0.40
codegen_flags: <defaults>
</compile_context>

<pallas_src>
import jax
import jax.numpy as jnp
from jax import lax
from jax.experimental import pallas as pl
from jax.experimental.pallas import tpu as pltpu

# ---------------- deterministic "configer" values (synthetic) ----------------
TEMPERATURE = 0.1
BASE_TEMPERATURE = 0.07
MAX_SAMPLES = 64            # contrast.max_samples
MAX_VIEWS = 32              # attribute parity only (unused numerically, as in torch code)
IGNORE_INDEX = -1
CONTRAST_LOSS_WEIGHT = 0.1  # contrast.loss_weight
SEG_LOSS_WEIGHT = 1.0       # FSAuxCELoss weights (standard openseg defaults)
AUX_LOSS_WEIGHT = 0.4


# =========  Pallas kernel 1: fused bilinear-upsample + dual-head pixel CE  =========
def _make_fused_ce_kernel(num_classes, hs):
    """Kernel over grid (batch, output-row-tile).

    Refs:
      seg_ref, aux_ref : (1, C*Hs, Ws)  pre-upsample logits (native layout, free reshape)
      mh_ref           : (TH, Hs)       row slice of the height interpolation matrix
      mw_ref           : (Wt, Ws)       width interpolation matrix
      tgt_ref          : (1, TH, Wt)    int32 labels for this tile
      out_ref          : (3,) SMEM      [sum_ce_seg, sum_ce_aux, n_valid_pixels]
      acc_ref          : (3,) SMEM scratch accumulator (persists across grid steps)
    """

    def kernel(seg_ref, aux_ref, mh_ref, mw_ref, tgt_ref, out_ref, acc_ref):
        @pl.when((pl.program_id(0) == 0) & (pl.program_id(1) == 0))
        def _init():
            acc_ref[0] = 0.0
            acc_ref[1] = 0.0
            acc_ref[2] = 0.0

        mh = mh_ref[...].astype(jnp.float32)                 # (TH, Hs)
        mw = mw_ref[...].astype(jnp.float32)                 # (Wt, Ws)
        tgt = tgt_ref[0]                                     # (TH, Wt) int32
        validf = (tgt != IGNORE_INDEX).astype(jnp.float32)   # shared by both heads
        th, wt = tgt.shape

        def head_ce_sum(x_ref):
            segr = x_ref[0].astype(jnp.float32)              # (C*Hs, Ws)
            # width upsample for every (class, source-row) at once (MXU)
            wu = lax.dot_general(segr, mw, (((1,), (1,)), ((), ())),
                                 preferred_element_type=jnp.float32)     # (C*Hs, Wt)
            # height upsample per class + online softmax over classes
            m = jnp.full((th, wt), -jnp.inf, dtype=jnp.float32)
            s = jnp.zeros((th, wt), dtype=jnp.float32)
            tgt_logit = jnp.zeros((th, wt), dtype=jnp.float32)
            for c in range(num_classes):                     # static unroll, C is small
                logit_c = lax.dot_general(
                    mh, wu[c * hs:(c + 1) * hs, :],
                    (((1,), (0,)), ((), ())),
                    preferred_element_type=jnp.float32)      # (TH, Wt) upsampled logits, class c
                new_m = jnp.maximum(m, logit_c)
                s = s * jnp.exp(m - new_m) + jnp.exp(logit_c - new_m)
                tgt_logit = jnp.where(tgt == c, logit_c, tgt_logit)
                m = new_m
            # CE = logsumexp - target logit, masked to non-ignored pixels
            per_pix = (m + jnp.log(s) - tgt_logit) * validf
            return jnp.sum(per_pix)

        acc_ref[0] += head_ce_sum(seg_ref)
        acc_ref[1] += head_ce_sum(aux_ref)
        acc_ref[2] += jnp.sum(validf)
        # untiled (resident) SMEM output: the last grid step's write holds the global totals
        out_ref[0] = acc_ref[0]
        out_ref[1] = acc_ref[1]
        out_ref[2] = acc_ref[2]

    return kernel


def _pick_row_tile(ht, wt, max_pixels=32768):
    # Largest row tile TH that divides Ht, keeps the (TH, Wt) pixel tile bounded (lane-dense
    # 8K-32K pixels at production sizes) and respects sublane tiling (TH % 8 == 0 or TH == Ht).
    best = None
    for d in range(1, ht + 1):
        if ht % d:
            continue
        if d != ht and d % 8 != 0:
            continue
        if d * wt <= max_pixels:
            best = d
    if best is None:
        best = 8 if ht % 8 == 0 else ht
    return best


def fused_aux_ce_pallas(seg, seg_aux, target, mh, mw):
    # seg/seg_aux: (B, C, Hs, Ws) ; target: (B, Ht, Wt) int ; mh: (Ht, Hs) ; mw: (Wt, Ws)
    B, C, Hs, Ws = seg.shape
    Ht, Wt = target.shape[1], target.shape[2]
    th = _pick_row_tile(Ht, Wt)

    segr = seg.reshape(B, C * Hs, Ws)        # pure row-major reshape (no transpose/copy)
    auxr = seg_aux.reshape(B, C * Hs, Ws)
    tgt = target.astype(jnp.int32)

    sums = pl.pallas_call(
        _make_fused_ce_kernel(C, Hs),
        out_shape=jax.ShapeDtypeStruct((3,), jnp.float32),
        grid=(B, Ht // th),
        in_specs=[
            pl.BlockSpec((1, C * Hs, Ws), lambda b, t: (b, 0, 0)),   # seg (revisit-cached per b)
            pl.BlockSpec((1, C * Hs, Ws), lambda b, t: (b, 0, 0)),   # seg_aux
            pl.BlockSpec((th, Hs), lambda b, t: (t, 0)),             # Mh row tile
            pl.BlockSpec((Wt, Ws), lambda b, t: (0, 0)),             # Mw (whole)
            pl.BlockSpec((1, th, Wt), lambda b, t: (b, t, 0)),       # target tile
        ],
        out_specs=pl.BlockSpec(memory_space=pltpu.MemorySpace.SMEM),
        scratch_shapes=[pltpu.SMEM((3,), jnp.float32)],
        compiler_params=pltpu.CompilerParams(
            dimension_semantics=("arbitrary", "arbitrary"),   # shared accumulator across grid
            vmem_limit_bytes=32 * 1024 * 1024,
        ),
    )(segr, auxr, mh.astype(jnp.float32), mw.astype(jnp.float32), tgt)

    num_seg, num_aux, den = sums[0], sums[1], sums[2]
    den = jnp.maximum(den, 1.0)
    # both heads share the same valid-pixel denominator -> weighted sum of pixel means
    return (SEG_LOSS_WEIGHT * num_seg + AUX_LOSS_WEIGHT * num_aux) / den


# ==============  Pallas kernel 2: PixelContrastLoss._contrastive  ==============
def _contrastive_kernel(feat_ref, lab_col_ref, lab_row_ref, o_ref):
    # feat_ref: (N, Dp) ; lab_col: (N, 1) int32 ; lab_row: (1, N) int32 ; o_ref: (1, 1) SMEM
    x = feat_ref[...].astype(jnp.float32)
    n = x.shape[0]
    lab_c = lab_col_ref[...]
    lab_r = lab_row_ref[...]

    # fold 1/temperature into one operand: O(N*D) scaling instead of O(N^2)
    adc = lax.dot_general(x * (1.0 / TEMPERATURE), x, (((1,), (1,)), ((), ())),
                          preferred_element_type=jnp.float32)            # (N, N)
    logits = adc - jnp.max(adc, axis=1, keepdims=True)

    same = lab_c == lab_r                                                # (N, N) bool
    row_ids = lax.broadcasted_iota(jnp.int32, (n, n), 0)
    col_ids = lax.broadcasted_iota(jnp.int32, (n, n), 1)
    pos_mask = jnp.where(same & (row_ids != col_ids), 1.0, 0.0)          # same label, off-diagonal

    exp_logits = jnp.exp(logits)
    neg_sum = jnp.sum(jnp.where(same, 0.0, exp_logits), axis=1, keepdims=True)
    log_prob = logits - jnp.log(exp_logits + neg_sum)

    pos_cnt = jnp.sum(pos_mask, axis=1, keepdims=True)
    # guard rows with zero positives (torch would produce nan there)
    mean_log_prob_pos = (jnp.sum(pos_mask * log_prob, axis=1, keepdims=True)
                         / jnp.maximum(pos_cnt, 1.0))
    loss_vec = -(TEMPERATURE / BASE_TEMPERATURE) * mean_log_prob_pos
    o_ref[0, 0] = jnp.sum(loss_vec) * (1.0 / n)


def contrastive_loss_pallas(features_, labels_):
    # features_: (A, V, D) f32 ; labels_: (A,) int
    A, V, D = features_.shape
    N = A * V
    # torch.cat(torch.unbind(features_, dim=1), dim=0) is view-major ordering:
    cf = jnp.transpose(features_, (1, 0, 2)).reshape(N, D).astype(jnp.float32)
    Dp = max(128, ((D + 127) // 128) * 128)     # pad contraction dim to an MXU-native width
    if Dp != D:
        cf = jnp.pad(cf, ((0, 0), (0, Dp - D)))
    lab_full = jnp.tile(labels_.astype(jnp.int32), (V,))    # mask.repeat(V, V) equivalent
    lab_col = lab_full.reshape(N, 1)
    lab_row = lab_full.reshape(1, N)
    out = pl.pallas_call(
        _contrastive_kernel,
        out_shape=jax.ShapeDtypeStruct((1, 1), jnp.float32),
        in_specs=[pl.BlockSpec(memory_space=pltpu.MemorySpace.VMEM)] * 3,
        out_specs=pl.BlockSpec(memory_space=pltpu.MemorySpace.SMEM),
    )(cf, lab_col, lab_row)
    return out[0, 0]


# ==============================  plain-JAX glue  ==============================
def bilinear_matrix(in_size, out_size):
    # F.interpolate(..., mode='bilinear', align_corners=True) as a (out, in) matmul matrix
    i = jnp.arange(out_size, dtype=jnp.float32)
    if out_size == 1:
        src = jnp.zeros_like(i)
    else:
        src = i * (in_size - 1) / (out_size - 1)
    i0 = jnp.clip(jnp.floor(src).astype(jnp.int32), 0, in_size - 1)
    i1 = jnp.clip(i0 + 1, 0, in_size - 1)
    w1 = src - i0.astype(jnp.float32)
    w0 = 1.0 - w1
    M = jnp.zeros((out_size, in_size), jnp.float32)
    M = M.at[jnp.arange(out_size), i0].add(w0)
    M = M.at[jnp.arange(out_size), i1].add(w1)
    return M


def nearest_downsample_labels(target, out_h, out_w):
    # F.interpolate(labels[:,None].float(), (out_h,out_w), mode='nearest').long()
    B, H, W = target.shape
    hi = jnp.floor(jnp.arange(out_h) * (H / out_h)).astype(jnp.int32)
    wi = jnp.floor(jnp.arange(out_w) * (W / out_w)).astype(jnp.int32)
    return target[:, hi[:, None], wi[None, :]]


def hard_anchor_sampling(feats, gt, num_classes, max_samples):
    # feats: (B, P, D) f32 ; gt: (B, P) int32
    # TODO(synk): torch uses per-image torch.unique (data-dependent class counts),
    # torch.randperm sampling and global pos_list/neg_list replay buffers; here every class
    # is assumed present in every image (guaranteed by the synthetic inputs) and hard/easy
    # selection is deterministic first-k instead of a random permutation.
    B, P, D = feats.shape
    total_classes = B * num_classes
    n_view = max_samples // total_classes
    easy_view = n_view // 2
    hard_view = n_view - easy_view
    cls = jnp.arange(num_classes, dtype=gt.dtype)
    is_easy = gt[:, None, :] == cls[None, :, None]                       # (B, n_cls, P)
    easy_first = jnp.argsort(jnp.where(is_easy, 0, 1), axis=-1)          # stable: easy pixels first
    hard_first = jnp.argsort(jnp.where(is_easy, 1, 0), axis=-1)          # stable: hard pixels first
    idx = jnp.concatenate([hard_first[..., :hard_view],
                           easy_first[..., :easy_view]], axis=-1)        # (B, n_cls, n_view)
    X_ = jnp.take_along_axis(feats[:, None, :, :], idx[..., None], axis=2)  # (B, n_cls, n_view, D)
    X_ = X_.reshape(total_classes, n_view, D)
    y_ = jnp.tile(cls.astype(jnp.int32), (B,))                           # (total_classes,)
    return X_, y_


def contrast_aux_ce_loss(seg, seg_aux, embed, target, with_embed=False):
    # seg, seg_aux: (B, n_cls, Hs, Ws) ; embed: (B, D, Hs, Ws) ; target: (B, Ht, Wt) int32
    B, n_cls, Hs, Ws = seg.shape
    Ht, Wt = target.shape[1], target.shape[2]

    # bilinear (align_corners=True) upsample fused INTO the CE kernel via the separable
    # interpolation matrices (no full-resolution logits ever hit HBM)
    Mh = bilinear_matrix(Hs, Ht)
    Mw = bilinear_matrix(Ws, Wt)
    loss = fused_aux_ce_pallas(seg, seg_aux, target, Mh, Mw)

    # _, predict = torch.max(seg, 1)  (kept for parity; unused by the sampling, as in torch)
    predict = jnp.argmax(seg, axis=1)
    del predict

    # PixelContrastLoss
    labels_small = nearest_downsample_labels(target, Hs, Ws)                   # (B, Hs, Ws)
    labels_flat = labels_small.reshape(B, -1)
    feats = jnp.transpose(embed, (0, 2, 3, 1)).reshape(B, -1, embed.shape[1])  # (B, P, D)
    X_, y_ = hard_anchor_sampling(feats, labels_flat, n_cls, MAX_SAMPLES)
    loss_contrast = contrastive_loss_pallas(X_, y_)

    if with_embed:
        return loss + CONTRAST_LOSS_WEIGHT * loss_contrast
    return loss + 0.0 * loss_contrast


# ==================================  main  ==================================
if __name__ == "__main__":
    key = jax.random.PRNGKey(0)
    k1, k2, k3 = jax.random.split(key, 3)

    B, n_cls, D = 2, 4, 32
    Hs = Ws = 8       # seg / embed spatial size
    Ht = Wt = 16      # target spatial size

    seg = jax.random.normal(k1, (B, n_cls, Hs, Ws), dtype=jnp.float32)
    seg_aux = jax.random.normal(k2, (B, n_cls, Hs, Ws), dtype=jnp.float32)
    embed = jax.random.normal(k3, (B, D, Hs, Ws), dtype=jnp.float32)
    # L2-normalize the embedding over channels, matching the ProjectionHead output that feeds
    # PixelContrastLoss in the reference model. Un-normalized random features make exp() in the
    # InfoNCE term underflow (log(0) = -inf), which was the source of the previous NaN.
    embed = embed / jnp.maximum(
        jnp.sqrt(jnp.sum(embed * embed, axis=1, keepdims=True)), 1e-12)

    # quadrant label map -> every class present in every image (also after nearest downsample)
    q = jnp.zeros((Ht, Wt), dtype=jnp.int32)
    q = q.at[:Ht // 2, Wt // 2:].set(1)
    q = q.at[Ht // 2:, :Wt // 2].set(2)
    q = q.at[Ht // 2:, Wt // 2:].set(3)
    target = jnp.stack([q, jnp.flip(q, axis=0)], axis=0)   # (B, Ht, Wt)

    loss = contrast_aux_ce_loss(seg, seg_aux, embed, target, with_embed=False)
    loss = jax.block_until_ready(loss)
    assert jnp.isfinite(loss)
    print("KERNEL_OK")
</pallas_src>

<mosaic_0001>
module attributes {stable_mosaic.version = 11 : i64} {
  func.func @kernel(%arg0: i32, %arg1: i32, %arg2: memref<1x32x8xf32, #tpu.memory_space<vmem>>, %arg3: memref<1x32x8xf32, #tpu.memory_space<vmem>>, %arg4: memref<16x8xf32, #tpu.memory_space<vmem>>, %arg5: memref<16x8xf32, #tpu.memory_space<vmem>>, %arg6: memref<1x16x16xi32, #tpu.memory_space<vmem>>, %arg7: memref<3xf32, #tpu.memory_space<smem>>, %arg8: memref<3xf32, #tpu.memory_space<smem>>) attributes {dimension_semantics = [#tpu.dimension_semantics<arbitrary>, #tpu.dimension_semantics<arbitrary>], iteration_bounds = array<i64: 2, 1>, scalar_prefetch = 0 : i64, scratch_operands = 1 : i64, tpu.core_type = #tpu.core_type<tc>, window_params = [{transform_indices = @transform_0, window_bounds = array<i64: 1, 32, 8>}, {transform_indices = @transform_1, window_bounds = array<i64: 1, 32, 8>}, {transform_indices = @transform_2, window_bounds = array<i64: 16, 8>}, {pipeline_mode = #tpu.pipeline_mode<synchronous>, transform_indices = @transform_3, window_bounds = array<i64: 16, 8>}, {transform_indices = @transform_4, window_bounds = array<i64: 1, 16, 16>}, {transform_indices = @transform_5, window_bounds = array<i64: 3>}]} {
    %c0_i32 = arith.constant 0 : i32
    %0 = arith.cmpi eq, %arg0, %c0_i32 : i32
    %c0_i32_0 = arith.constant 0 : i32
    %1 = arith.cmpi eq, %arg1, %c0_i32_0 : i32
    %2 = arith.andi %0, %1 : i1
    %3 = arith.extui %2 : i1 to i32
    %c0_i32_1 = arith.constant 0 : i32
    %4 = arith.cmpi ne, %3, %c0_i32_1 : i32
    scf.if %4 {
      %cst_47 = arith.constant 0.000000e+00 : f32
      %c0_48 = arith.constant 0 : index
      %156 = memref.load %arg8[%c0_48] : memref<3xf32, #tpu.memory_space<smem>>
      memref.store %cst_47, %arg8[%c0_48] : memref<3xf32, #tpu.memory_space<smem>>
      %cst_49 = arith.constant 0.000000e+00 : f32
      %c1_50 = arith.constant 1 : index
      %157 = memref.load %arg8[%c1_50] : memref<3xf32, #tpu.memory_space<smem>>
      memref.store %cst_49, %arg8[%c1_50] : memref<3xf32, #tpu.memory_space<smem>>
      %cst_51 = arith.constant 0.000000e+00 : f32
      %c2_52 = arith.constant 2 : index
      %158 = memref.load %arg8[%c2_52] : memref<3xf32, #tpu.memory_space<smem>>
      memref.store %cst_51, %arg8[%c2_52] : memref<3xf32, #tpu.memory_space<smem>>
    } else {
    }
    %c0 = arith.constant 0 : index
    %c0_2 = arith.constant 0 : index
    %5 = vector.load %arg4[%c0, %c0_2] : memref<16x8xf32, #tpu.memory_space<vmem>>, vector<16x8xf32>
    %c0_3 = arith.constant 0 : index
    %c0_4 = arith.constant 0 : index
    %6 = vector.load %arg5[%c0_3, %c0_4] : memref<16x8xf32, #tpu.memory_space<vmem>>, vector<16x8xf32>
    %c0_5 = arith.constant 0 : index
    %c0_6 = arith.constant 0 : index
    %c0_7 = arith.constant 0 : index
    %7 = vector.load %arg6[%c0_5, %c0_6, %c0_7] : memref<1x16x16xi32, #tpu.memory_space<vmem>>, vector<1x16x16xi32>
    %8 = vector.shape_cast %7 : vector<1x16x16xi32> to vector<16x16xi32>
    %c-1_i32 = arith.constant -1 : i32
    %9 = vector.broadcast %c-1_i32 : i32 to vector<16x16xi32>
    %10 = arith.cmpi ne, %8, %9 : vector<16x16xi32>
    %11 = arith.extui %10 : vector<16x16xi1> to vector<16x16xi32>
    %12 = arith.sitofp %11 : vector<16x16xi32> to vector<16x16xf32>
    %c0_8 = arith.constant 0 : index
    %13 = memref.load %arg8[%c0_8] : memref<3xf32, #tpu.memory_space<smem>>
    %c0_9 = arith.constant 0 : index
    %c0_10 = arith.constant 0 : index
    %c0_11 = arith.constant 0 : index
    %14 = vector.load %arg2[%c0_9, %c0_10, %c0_11] : memref<1x32x8xf32, #tpu.memory_space<vmem>>, vector<1x32x8xf32>
    %15 = vector.shape_cast %14 : vector<1x32x8xf32> to vector<32x8xf32>
    %cst = arith.constant dense<0.000000e+00> : vector<32x16xf32>
    %16 = tpu.matmul %15, %6, %cst {dimension_numbers = #tpu.dot_dimension_numbers<[1], [1], [0], [0], [0, 0, 1, 0], [], []>} : vector<32x8xf32>, vector<16x8xf32>, vector<32x16xf32> -> vector<32x16xf32>
    %cst_12 = arith.constant 0xFF800000 : f32
    %17 = vector.broadcast %cst_12 : f32 to vector<16x16xf32>
    %cst_13 = arith.constant 0.000000e+00 : f32
    %18 = vector.broadcast %cst_13 : f32 to vector<16x16xf32>
    %cst_14 = arith.constant 0.000000e+00 : f32
    %19 = vector.broadcast %cst_14 : f32 to vector<16x16xf32>
    %20 = vector.extract_strided_slice %16 {offsets = [0, 0], sizes = [8, 16], strides = [1, 1]} : vector<32x16xf32> to vector<8x16xf32>
    %cst_15 = arith.constant dense<0.000000e+00> : vector<16x16xf32>
    %21 = tpu.matmul %5, %20, %cst_15 {dimension_numbers = #tpu.dot_dimension_numbers<[1], [0], [0], [1], [0, 0, 1, 1], [], []>} : vector<16x8xf32>, vector<8x16xf32>, vector<16x16xf32> -> vector<16x16xf32>
    %22 = arith.maximumf %17, %21 : vector<16x16xf32>
    %23 = arith.subf %17, %22 : vector<16x16xf32>
    %24 = math.exp %23 : vector<16x16xf32>
    %25 = arith.mulf %18, %24 : vector<16x16xf32>
    %26 = arith.subf %21, %22 : vector<16x16xf32>
    %27 = math.exp %26 : vector<16x16xf32>
    %28 = arith.addf %25, %27 : vector<16x16xf32>
    %c0_i32_16 = arith.constant 0 : i32
    %29 = vector.broadcast %c0_i32_16 : i32 to vector<16x16xi32>
    %30 = arith.cmpi eq, %8, %29 : vector<16x16xi32>
    %31 = arith.select %30, %21, %19 : vector<16x16xi1>, vector<16x16xf32>
    %32 = vector.extract_strided_slice %16 {offsets = [8, 0], sizes = [8, 16], strides = [1, 1]} : vector<32x16xf32> to vector<8x16xf32>
    %cst_17 = arith.constant dense<0.000000e+00> : vector<16x16xf32>
    %33 = tpu.matmul %5, %32, %cst_17 {dimension_numbers = #tpu.dot_dimension_numbers<[1], [0], [0], [1], [0, 0, 1, 1], [], []>} : vector<16x8xf32>, vector<8x16xf32>, vector<16x16xf32> -> vector<16x16xf32>
    %34 = arith.maximumf %22, %33 : vector<16x16xf32>
    %35 = arith.subf %22, %34 : vector<16x16xf32>
    %36 = math.exp %35 : vector<16x16xf32>
    %37 = arith.mulf %28, %36 : vector<16x16xf32>
    %38 = arith.subf %33, %34 : vector<16x16xf32>
    %39 = math.exp %38 : vector<16x16xf32>
    %40 = arith.addf %37, %39 : vector<16x16xf32>
    %c1_i32 = arith.constant 1 : i32
    %41 = vector.broadcast %c1_i32 : i32 to vector<16x16xi32>
    %42 = arith.cmpi eq, %8, %41 : vector<16x16xi32>
    %43 = arith.select %42, %33, %31 : vector<16x16xi1>, vector<16x16xf32>
    %44 = vector.extract_strided_slice %16 {offsets = [16, 0], sizes = [8, 16], strides = [1, 1]} : vector<32x16xf32> to vector<8x16xf32>
    %cst_18 = arith.constant dense<0.000000e+00> : vector<16x16xf32>
    %45 = tpu.matmul %5, %44, %cst_18 {dimension_numbers = #tpu.dot_dimension_numbers<[1], [0], [0], [1], [0, 0, 1, 1], [], []>} : vector<16x8xf32>, vector<8x16xf32>, vector<16x16xf32> -> vector<16x16xf32>
    %46 = arith.maximumf %34, %45 : vector<16x16xf32>
    %47 = arith.subf %34, %46 : vector<16x16xf32>
    %48 = math.exp %47 : vector<16x16xf32>
    %49 = arith.mulf %40, %48 : vector<16x16xf32>
    %50 = arith.subf %45, %46 : vector<16x16xf32>
    %51 = math.exp %50 : vector<16x16xf32>
    %52 = arith.addf %49, %51 : vector<16x16xf32>
    %c2_i32 = arith.constant 2 : i32
    %53 = vector.broadcast %c2_i32 : i32 to vector<16x16xi32>
    %54 = arith.cmpi eq, %8, %53 : vector<16x16xi32>
    %55 = arith.select %54, %45, %43 : vector<16x16xi1>, vector<16x16xf32>
    %56 = vector.extract_strided_slice %16 {offsets = [24, 0], sizes = [8, 16], strides = [1, 1]} : vector<32x16xf32> to vector<8x16xf32>
    %cst_19 = arith.constant dense<0.000000e+00> : vector<16x16xf32>
    %57 = tpu.matmul %5, %56, %cst_19 {dimension_numbers = #tpu.dot_dimension_numbers<[1], [0], [0], [1], [0, 0, 1, 1], [], []>} : vector<16x8xf32>, vector<8x16xf32>, vector<16x16xf32> -> vector<16x16xf32>
    %58 = arith.maximumf %46, %57 : vector<16x16xf32>
    %59 = arith.subf %46, %58 : vector<16x16xf32>
    %60 = math.exp %59 : vector<16x16xf32>
    %61 = arith.mulf %52, %60 : vector<16x16xf32>
    %62 = arith.subf %57, %58 : vector<16x16xf32>
    %63 = math.exp %62 : vector<16x16xf32>
    %64 = arith.addf %61, %63 : vector<16x16xf32>
    %c3_i32 = arith.constant 3 : i32
    %65 = vector.broadcast %c3_i32 : i32 to vector<16x16xi32>
    %66 = arith.cmpi eq, %8, %65 : vector<16x16xi32>
    %67 = arith.select %66, %57, %55 : vector<16x16xi1>, vector<16x16xf32>
    %68 = math.log %64 : vector<16x16xf32>
    %69 = arith.addf %58, %68 : vector<16x16xf32>
    %70 = arith.subf %69, %67 : vector<16x16xf32>
    %71 = arith.mulf %70, %12 : vector<16x16xf32>
    %72 = vector.shape_cast %71 : vector<16x16xf32> to vector<1x16x16xf32>
    %cst_20 = arith.constant dense<0.000000e+00> : vector<1xf32>
    %73 = vector.multi_reduction <add>, %72, %cst_20 [1, 2] : vector<1x16x16xf32> to vector<1xf32>
    %74 = vector.shape_cast %73 : vector<1xf32> to vector<1x1x1xf32>
    %75 = vector.extract %74[0, 0, 0] : f32 from vector<1x1x1xf32>
    %76 = arith.addf %13, %75 : f32
    %c0_21 = arith.constant 0 : index
    %77 = memref.load %arg8[%c0_21] : memref<3xf32, #tpu.memory_space<smem>>
    memref.store %76, %arg8[%c0_21] : memref<3xf32, #tpu.memory_space<smem>>
    %c1 = arith.constant 1 : index
    %78 = memref.load %arg8[%c1] : memref<3xf32, #tpu.memory_space<smem>>
    %c0_22 = arith.constant 0 : index
    %c0_23 = arith.constant 0 : index
    %c0_24 = arith.constant 0 : index
    %79 = vector.load %arg3[%c0_22, %c0_23, %c0_24] : memref<1x32x8xf32, #tpu.memory_space<vmem>>, vector<1x32x8xf32>
    %80 = vector.shape_cast %79 : vector<1x32x8xf32> to vector<32x8xf32>
    %cst_25 = arith.constant dense<0.000000e+00> : vector<32x16xf32>
    %81 = tpu.matmul %80, %6, %cst_25 {dimension_numbers = #tpu.dot_dimension_numbers<[1], [1], [0], [0], [0, 0, 1, 0], [], []>} : vector<32x8xf32>, vector<16x8xf32>, vector<32x16xf32> -> vector<32x16xf32>
    %cst_26 = arith.constant 0xFF800000 : f32
    %82 = vector.broadcast %cst_26 : f32 to vector<16x16xf32>
    %cst_27 = arith.constant 0.000000e+00 : f32
    %83 = vector.broadcast %cst_27 : f32 to vector<16x16xf32>
    %cst_28 = arith.constant 0.000000e+00 : f32
    %84 = vector.broadcast %cst_28 : f32 to vector<16x16xf32>
    %85 = vector.extract_strided_slice %81 {offsets = [0, 0], sizes = [8, 16], strides = [1, 1]} : vector<32x16xf32> to vector<8x16xf32>
    %cst_29 = arith.constant dense<0.000000e+00> : vector<16x16xf32>
    %86 = tpu.matmul %5, %85, %cst_29 {dimension_numbers = #tpu.dot_dimension_numbers<[1], [0], [0], [1], [0, 0, 1, 1], [], []>} : vector<16x8xf32>, vector<8x16xf32>, vector<16x16xf32> -> vector<16x16xf32>
    %87 = arith.maximumf %82, %86 : vector<16x16xf32>
    %88 = arith.subf %82, %87 : vector<16x16xf32>
    %89 = math.exp %88 : vector<16x16xf32>
    %90 = arith.mulf %83, %89 : vector<16x16xf32>
    %91 = arith.subf %86, %87 : vector<16x16xf32>
    %92 = math.exp %91 : vector<16x16xf32>
    %93 = arith.addf %90, %92 : vector<16x16xf32>
    %c0_i32_30 = arith.constant 0 : i32
    %94 = vector.broadcast %c0_i32_30 : i32 to vector<16x16xi32>
    %95 = arith.cmpi eq, %8, %94 : vector<16x16xi32>
    %96 = arith.select %95, %86, %84 : vector<16x16xi1>, vector<16x16xf32>
    %97 = vector.extract_strided_slice %81 {offsets = [8, 0], sizes = [8, 16], strides = [1, 1]} : vector<32x16xf32> to vector<8x16xf32>
    %cst_31 = arith.constant dense<0.000000e+00> : vector<16x16xf32>
    %98 = tpu.matmul %5, %97, %cst_31 {dimension_numbers = #tpu.dot_dimension_numbers<[1], [0], [0], [1], [0, 0, 1, 1], [], []>} : vector<16x8xf32>, vector<8x16xf32>, vector<16x16xf32> -> vector<16x16xf32>
    %99 = arith.maximumf %87, %98 : vector<16x16xf32>
    %100 = arith.subf %87, %99 : vector<16x16xf32>
    %101 = math.exp %100 : vector<16x16xf32>
    %102 = arith.mulf %93, %101 : vector<16x16xf32>
    %103 = arith.subf %98, %99 : vector<16x16xf32>
    %104 = math.exp %103 : vector<16x16xf32>
    %105 = arith.addf %102, %104 : vector<16x16xf32>
    %c1_i32_32 = arith.constant 1 : i32
    %106 = vector.broadcast %c1_i32_32 : i32 to vector<16x16xi32>
    %107 = arith.cmpi eq, %8, %106 : vector<16x16xi32>
    %108 = arith.select %107, %98, %96 : vector<16x16xi1>, vector<16x16xf32>
    %109 = vector.extract_strided_slice %81 {offsets = [16, 0], sizes = [8, 16], strides = [1, 1]} : vector<32x16xf32> to vector<8x16xf32>
    %cst_33 = arith.constant dense<0.000000e+00> : vector<16x16xf32>
    %110 = tpu.matmul %5, %109, %cst_33 {dimension_numbers = #tpu.dot_dimension_numbers<[1], [0], [0], [1], [0, 0, 1, 1], [], []>} : vector<16x8xf32>, vector<8x16xf32>, vector<16x16xf32> -> vector<16x16xf32>
    %111 = arith.maximumf %99, %110 : vector<16x16xf32>
    %112 = arith.subf %99, %111 : vector<16x16xf32>
    %113 = math.exp %112 : vector<16x16xf32>
    %114 = arith.mulf %105, %113 : vector<16x16xf32>
    %115 = arith.subf %110, %111 : vector<16x16xf32>
    %116 = math.exp %115 : vector<16x16xf32>
    %117 = arith.addf %114, %116 : vector<16x16xf32>
    %c2_i32_34 = arith.constant 2 : i32
    %118 = vector.broadcast %c2_i32_34 : i32 to vector<16x16xi32>
    %119 = arith.cmpi eq, %8, %118 : vector<16x16xi32>
    %120 = arith.select %119, %110, %108 : vector<16x16xi1>, vector<16x16xf32>
    %121 = vector.extract_strided_slice %81 {offsets = [24, 0], sizes = [8, 16], strides = [1, 1]} : vector<32x16xf32> to vector<8x16xf32>
    %cst_35 = arith.constant dense<0.000000e+00> : vector<16x16xf32>
    %122 = tpu.matmul %5, %121, %cst_35 {dimension_numbers = #tpu.dot_dimension_numbers<[1], [0], [0], [1], [0, 0, 1, 1], [], []>} : vector<16x8xf32>, vector<8x16xf32>, vector<16x16xf32> -> vector<16x16xf32>
    %123 = arith.maximumf %111, %122 : vector<16x16xf32>
    %124 = arith.subf %111, %123 : vector<16x16xf32>
    %125 = math.exp %124 : vector<16x16xf32>
    %126 = arith.mulf %117, %125 : vector<16x16xf32>
    %127 = arith.subf %122, %123 : vector<16x16xf32>
    %128 = math.exp %127 : vector<16x16xf32>
    %129 = arith.addf %126, %128 : vector<16x16xf32>
    %c3_i32_36 = arith.constant 3 : i32
    %130 = vector.broadcast %c3_i32_36 : i32 to vector<16x16xi32>
    %131 = arith.cmpi eq, %8, %130 : vector<16x16xi32>
    %132 = arith.select %131, %122, %120 : vector<16x16xi1>, vector<16x16xf32>
    %133 = math.log %129 : vector<16x16xf32>
    %134 = arith.addf %123, %133 : vector<16x16xf32>
    %135 = arith.subf %134, %132 : vector<16x16xf32>
    %136 = arith.mulf %135, %12 : vector<16x16xf32>
    %137 = vector.shape_cast %136 : vector<16x16xf32> to vector<1x16x16xf32>
    %cst_37 = arith.constant dense<0.000000e+00> : vector<1xf32>
    %138 = vector.multi_reduction <add>, %137, %cst_37 [1, 2] : vector<1x16x16xf32> to vector<1xf32>
    %139 = vector.shape_cast %138 : vector<1xf32> to vector<1x1x1xf32>
    %140 = vector.extract %139[0, 0, 0] : f32 from vector<1x1x1xf32>
    %141 = arith.addf %78, %140 : f32
    %c1_38 = arith.constant 1 : index
    %142 = memref.load %arg8[%c1_38] : memref<3xf32, #tpu.memory_space<smem>>
    memref.store %141, %arg8[%c1_38] : memref<3xf32, #tpu.memory_space<smem>>
    %c2 = arith.constant 2 : index
    %143 = memref.load %arg8[%c2] : memref<3xf32, #tpu.memory_space<smem>>
    %144 = vector.shape_cast %12 : vector<16x16xf32> to vector<1x16x16xf32>
    %cst_39 = arith.constant dense<0.000000e+00> : vector<1xf32>
    %145 = vector.multi_reduction <add>, %144, %cst_39 [1, 2] : vector<1x16x16xf32> to vector<1xf32>
    %146 = vector.shape_cast %145 : vector<1xf32> to vector<1x1x1xf32>
    %147 = vector.extract %146[0, 0, 0] : f32 from vector<1x1x1xf32>
    %148 = arith.addf %143, %147 : f32
    %c2_40 = arith.constant 2 : index
    %149 = memref.load %arg8[%c2_40] : memref<3xf32, #tpu.memory_space<smem>>
    memref.store %148, %arg8[%c2_40] : memref<3xf32, #tpu.memory_space<smem>>
    %c0_41 = arith.constant 0 : index
    %150 = memref.load %arg8[%c0_41] : memref<3xf32, #tpu.memory_space<smem>>
    %c0_42 = arith.constant 0 : index
    %151 = memref.load %arg7[%c0_42] : memref<3xf32, #tpu.memory_space<smem>>
    memref.store %150, %arg7[%c0_42] : memref<3xf32, #tpu.memory_space<smem>>
    %c1_43 = arith.constant 1 : index
    %152 = memref.load %arg8[%c1_43] : memref<3xf32, #tpu.memory_space<smem>>
    %c1_44 = arith.constant 1 : index
    %153 = memref.load %arg7[%c1_44] : memref<3xf32, #tpu.memory_space<smem>>
    memref.store %152, %arg7[%c1_44] : memref<3xf32, #tpu.memory_space<smem>>
    %c2_45 = arith.constant 2 : index
    %154 = memref.load %arg8[%c2_45] : memref<3xf32, #tpu.memory_space<smem>>
    %c2_46 = arith.constant 2 : index
    %155 = memref.load %arg7[%c2_46] : memref<3xf32, #tpu.memory_space<smem>>
    memref.store %154, %arg7[%c2_46] : memref<3xf32, #tpu.memory_space<smem>>
    return
  }
  func.func @transform_0(%arg0: i32, %arg1: i32) -> (i32, i32, i32) {
    %c0_i32 = arith.constant 0 : i32
    %c0_i32_0 = arith.constant 0 : i32
    %c0_i32_1 = arith.constant 0 : i32
    return %arg0, %c0_i32, %c0_i32_0 : i32, i32, i32
  }
  func.func @transform_1(%arg0: i32, %arg1: i32) -> (i32, i32, i32) {
    %c0_i32 = arith.constant 0 : i32
    %c0_i32_0 = arith.constant 0 : i32
    %c0_i32_1 = arith.constant 0 : i32
    return %arg0, %c0_i32, %c0_i32_0 : i32, i32, i32
  }
  func.func @transform_2(%arg0: i32, %arg1: i32) -> (i32, i32) {
    %c0_i32 = arith.constant 0 : i32
    %c0_i32_0 = arith.constant 0 : i32
    return %arg1, %c0_i32 : i32, i32
  }
  func.func @transform_3(%arg0: i32, %arg1: i32) -> (i32, i32) {
    %c0_i32 = arith.constant 0 : i32
    %c0_i32_0 = arith.constant 0 : i32
    %c0_i32_1 = arith.constant 0 : i32
    return %c0_i32, %c0_i32_0 : i32, i32
  }
  func.func @transform_4(%arg0: i32, %arg1: i32) -> (i32, i32, i32) {
    %c0_i32 = arith.constant 0 : i32
    %c0_i32_0 = arith.constant 0 : i32
    return %arg0, %arg1, %c0_i32 : i32, i32, i32
  }
  func.func @transform_5(%arg0: i32, %arg1: i32) -> i32 {
    %c0_i32 = arith.constant 0 : i32
    %c0_i32_0 = arith.constant 0 : i32
    return %c0_i32 : i32
  }
}

</mosaic_0001>

<llo_original>
// kernel: tpu_custom_call.1
$region0: #{tpu_custom_call.1}
  #allocation0 [shape = 'u32[]', space=smem, size = 0x4, offset = 0x4, fixed_abs, tag = 'smem constant byte address 0x4 - core index']
  #allocation1 [shape = 'u32[72,128]{1,0:T(1,128)}', space=vmem, size = 0x9000, scoped, tag = 'internal scratch']
  #allocation2 [shape = 'f32[3]{0:T(128)}', space=smem, size = 0x200, scoped, tag = 'scratch operand']
  %s0 = inlined_call_operand.vmem [shape: f32[2,32,8], index: 0, kind: input, shape index: {}]
  %s1 = inlined_call_operand.vmem [shape: f32[2,32,8], index: 1, kind: input, shape index: {}]
  %s2 = inlined_call_operand.vmem [shape: f32[16,8], index: 2, kind: input, shape index: {}]
  %s3 = inlined_call_operand.vmem [shape: f32[16,8], index: 3, kind: input, shape index: {}]
  %s4 = inlined_call_operand.vmem [shape: s32[2,16,16], index: 4, kind: input, shape index: {}]
  %s5 = inlined_call_operand.hbm [shape: f32[3], index: 5, kind: output, shape index: {}]
  %s6 = sld [smem:[#allocation0]]
  $region57: #{tpu_custom_call.1} parent=0
    _
  %s8 = ssub.s32 1, %s6
  %s9 = scalar_select 0, %s8, %s6
  $region1: #{tpu_custom_call.1} parent=0
    #allocation3 [shape = 'u8[512]{0}', space=smem, size = 0x200, scoped, tag = 'output window, operand 0, single buffered']
    #allocation4 [shape = 's32[2]{0}', space=sflag, size = 0x8, scoped, tag = 'scoped memory for tpu_custom_call.1']
    %10 = vsyncpa [#allocation4], 0
    loop: start=0, step=1, limit=4
    $region2: #{tpu_custom_call.1} parent=1 // loop_pre_header
      _
    $region3: #{tpu_custom_call.1} parent=1 // loop_header
      %s12 = sphi 0, %s16
      %p13 = scmp.ge.s32.totalorder %s12, 4
      %s19 = sphi 0, %s31
      %s20 = sphi 0, %s27
      %s21 = sphi 0, %s19
      %s22 = sphi 0, %s20
      %s23 = sphi 0, %s21
      %s24 = sphi 0, %s22
      %s34 = sphi 0, %s36
      %s37 = sphi 0, %s34
      %s38 = sphi 0, %s37
      %s54 = sphi 0, %s38
      %s60 = sphi 0, %s62
      %s63 = sphi 0, %s60
      %s64 = sphi 0, %s63
      %s80 = sphi 0, %s64
      %s86 = sphi 0, %s88
      %s89 = sphi 0, %s86
      %s90 = sphi 0, %s89
      %s106 = sphi 0, %s90
      %s110 = sphi 0, %s110
      %s112 = sphi 0, %s110
      %s113 = sphi 0, %s112
      %s127 = sphi 0, %s113
      %s135 = sphi 0, %s137
      %s138 = sphi 0, %s135
      %s139 = sphi 0, %s138
      %s155 = sphi 0, %s139
      %s159 = sphi 0, %s159
      %s161 = sphi 0, %s159
      %s162 = sphi 0, %s161
      %s176 = sphi 0, %s162
    $region4: #{tpu_custom_call.1} parent=1 // loop_header_branch
      %15 = sbr.rel (%p13) target = $region8
    $region5: #{tpu_custom_call.1} parent=1 // loop_body
      %s17 = ssub.s32 %s12, 1
      %s18 = ssub.s32 %s12, 2
      %s25 = sadd.s32 1, %s20
      %p26 = scmp.ge.s32.totalorder %s25, 1
      %s27 = scalar_select %p26, 0, %s25
      %s28 = sadd.s32 1, %s19
      %s29 = scalar_select %p26, %s28, %s19
      %p30 = scmp.ge.s32.totalorder %s29, 2
      %s31 = scalar_select %p30, 0, %s29
      %s32 = ssub.s32 %s19, %s31
      %p33 = scmp.eq.s32.totalorder %s32, 0
      %s35 = sadd.s32 %s34, 1
      %s36 = scalar_select %p33, %s34, %s35
      %p39 = pneg %p33
      %p40 = scmp.eq.s32.totalorder %s12, 1
      %p41 = por %p39, %p40
      %p42 = scmp.ne.s32.totalorder %s34, %s37
      %p43 = scmp.eq.s32.totalorder %s12, 0
      %p44 = por %p42, %p43
      %p45 = scmp.ne.s32.totalorder %s34, %s37
      %p46 = scmp.eq.s32.totalorder %s17, 1
      %p47 = por %p45, %p46
      %p48 = scmp.ne.s32.totalorder %s37, %s38
      %p49 = scmp.eq.s32.totalorder %s17, 0
      %p50 = por %p48, %p49
      %p51 = scmp.ne.s32.totalorder %s37, %s38
      %p52 = scmp.eq.s32.totalorder %s18, 1
      %p53 = por %p51, %p52
      %p55 = scmp.ne.s32.totalorder %s38, %s54
      %p56 = scmp.eq.s32.totalorder %s18, 0
      %p57 = por %p55, %p56
      %s58 = ssub.s32 %s19, %s31
      %p59 = scmp.eq.s32.totalorder %s58, 0
      %s61 = sadd.s32 %s60, 1
      %s62 = scalar_select %p59, %s60, %s61
      %p65 = pneg %p59
      %p66 = scmp.eq.s32.totalorder %s12, 1
      %p67 = por %p65, %p66
      %p68 = scmp.ne.s32.totalorder %s60, %s63
      %p69 = scmp.eq.s32.totalorder %s12, 0
      %p70 = por %p68, %p69
      %p71 = scmp.ne.s32.totalorder %s60, %s63
      %p72 = scmp.eq.s32.totalorder %s17, 1
      %p73 = por %p71, %p72
      %p74 = scmp.ne.s32.totalorder %s63, %s64
      %p75 = scmp.eq.s32.totalorder %s17, 0
      %p76 = por %p74, %p75
      %p77 = scmp.ne.s32.totalorder %s63, %s64
      %p78 = scmp.eq.s32.totalorder %s18, 1
      %p79 = por %p77, %p78
      %p81 = scmp.ne.s32.totalorder %s64, %s80
      %p82 = scmp.eq.s32.totalorder %s18, 0
      %p83 = por %p81, %p82
      %s84 = ssub.s32 %s20, %s27
      %p85 = scmp.eq.s32.totalorder %s84, 0
      %s87 = sadd.s32 %s86, 1
      %s88 = scalar_select %p85, %s86, %s87
      %p91 = pneg %p85
      %p92 = scmp.eq.s32.totalorder %s12, 1
      %p93 = por %p91, %p92
      %p94 = scmp.ne.s32.totalorder %s86, %s89
      %p95 = scmp.eq.s32.totalorder %s12, 0
      %p96 = por %p94, %p95
      %p97 = scmp.ne.s32.totalorder %s86, %s89
      %p98 = scmp.eq.s32.totalorder %s17, 1
      %p99 = por %p97, %p98
      %p100 = scmp.ne.s32.totalorder %s89, %s90
      %p101 = scmp.eq.s32.totalorder %s17, 0
      %p102 = por %p100, %p101
      %p103 = scmp.ne.s32.totalorder %s89, %s90
      %p104 = scmp.eq.s32.totalorder %s18, 1
      %p105 = por %p103, %p104
      %p107 = scmp.ne.s32.totalorder %s90, %s106
      %p108 = scmp.eq.s32.totalorder %s18, 0
      %p109 = por %p107, %p108
      %s111 = sadd.s32 %s110, 1
      %p114 = scmp.eq.s32.totalorder %s12, 1
      %p115 = scmp.ne.s32.totalorder %s110, %s112
      %p116 = scmp.eq.s32.totalorder %s12, 0
      %p117 = por %p115, %p116
      %p118 = scmp.ne.s32.totalorder %s110, %s112
      %p119 = scmp.eq.s32.totalorder %s17, 1
      %p120 = por %p118, %p119
      %p121 = scmp.ne.s32.totalorder %s112, %s113
      %p122 = scmp.eq.s32.totalorder %s17, 0
      %p123 = por %p121, %p122
      %p124 = scmp.ne.s32.totalorder %s112, %s113
      %p125 = scmp.eq.s32.totalorder %s18, 1
      %p126 = por %p124, %p125
      %p128 = scmp.ne.s32.totalorder %s113, %s127
      %p129 = scmp.eq.s32.totalorder %s18, 0
      %p130 = por %p128, %p129
      %s131 = ssub.s32 %s19, %s31
      %s132 = ssub.s32 %s20, %s27
      %s133 = sor.u32 %s131, %s132
      %p134 = scmp.eq.s32.totalorder %s133, 0
      %s136 = sadd.s32 %s135, 1
      %s137 = scalar_select %p134, %s135, %s136
      %p140 = pneg %p134
      %p141 = scmp.eq.s32.totalorder %s12, 1
      %p142 = por %p140, %p141
      %p143 = scmp.ne.s32.totalorder %s135, %s138
      %p144 = scmp.eq.s32.totalorder %s12, 0
      %p145 = por %p143, %p144
      %p146 = scmp.ne.s32.totalorder %s135, %s138
      %p147 = scmp.eq.s32.totalorder %s17, 1
      %p148 = por %p146, %p147
      %p149 = scmp.ne.s32.totalorder %s138, %s139
      %p150 = scmp.eq.s32.totalorder %s17, 0
      %p151 = por %p149, %p150
      %p152 = scmp.ne.s32.totalorder %s138, %s139
      %p153 = scmp.eq.s32.totalorder %s18, 1
      %p154 = por %p152, %p153
      %p156 = scmp.ne.s32.totalorder %s139, %s155
      %p157 = scmp.eq.s32.totalorder %s18, 0
      %p158 = por %p156, %p157
      %s160 = sadd.s32 %s159, 1
      %p163 = scmp.eq.s32.totalorder %s12, 1
      %p164 = scmp.ne.s32.totalorder %s159, %s161
      %p165 = scmp.eq.s32.totalorder %s12, 0
      %p166 = por %p164, %p165
      %p167 = scmp.ne.s32.totalorder %s159, %s161
      %p168 = scmp.eq.s32.totalorder %s17, 1
      %p169 = por %p167, %p168
      %p170 = scmp.ne.s32.totalorder %s161, %s162
      %p171 = scmp.eq.s32.totalorder %s17, 0
      %p172 = por %p170, %p171
      %p173 = scmp.ne.s32.totalorder %s161, %s162
      %p174 = scmp.eq.s32.totalorder %s18, 1
      %p175 = por %p173, %p174
      %p177 = scmp.ne.s32.totalorder %s162, %s176
      %p178 = scmp.eq.s32.totalorder %s18, 0
      %p179 = por %p177, %p178
      %p180 = scmp.le.s32.totalorder 1, %s12
      %p181 = scmp.lt.s32.totalorder %s12, 3
      %p182 = pnand %p180, %p181
      %p183 = pneg %p182
      // Predicated region
      $region9: #{tpu_custom_call.1} parent=5 // pred_check
        _
      $region10: #{tpu_custom_call.1} parent=5 // pred_check_branch
        %185 = sbr.rel (%p182) target = $region12
      $region11: #{tpu_custom_call.1} parent=5 // pred_region
        %s186 = ssub.s32 %s12, 1
        // Predicated region
        $region13: #{tpu_custom_call.1} parent=11 // pred_check
          %p187 = pneg %p102
        $region14: #{tpu_custom_call.1} parent=11 // pred_check_branch
          %189 = sbr.rel (%p187) target = $region16
        $region15: #{tpu_custom_call.1} parent=11 // pred_region
          %s190 = smul.u32 2, %s22
          %p191 = scmp.lt.s32.totalorder %s190, 1
          %s192 = scalar_select %p191, %s190, 1
          %s193 = smul.addr %s192, 8
          %s194 = scalar_lea.vmem %s2, %s193
          %s195 = smul.u32 2, %s22
        $region16: #{tpu_custom_call.1} parent=11 // pred_fallthru
          _
        // Predicated region
        $region17: #{tpu_custom_call.1} parent=11 // pred_check
          %p196 = pneg %p123
        $region18: #{tpu_custom_call.1} parent=11 // pred_check_branch
          %198 = sbr.rel (%p196) target = $region20
        $region19: #{tpu_custom_call.1} parent=11 // pred_region
          _
        $region20: #{tpu_custom_call.1} parent=11 // pred_fallthru
          _
      $region12: #{tpu_custom_call.1} parent=5 // pred_fallthru
        _
      %p199 = scmp.lt.s32.totalorder %s12, 2
      // Predicated region
      $region21: #{tpu_custom_call.1} parent=5 // pred_check
        %p200 = pneg %p199
      $region22: #{tpu_custom_call.1} parent=5 // pred_check_branch
        %202 = sbr.rel (%p200) target = $region24
      $region23: #{tpu_custom_call.1} parent=5 // pred_region
        // Predicated region
        $region25: #{tpu_custom_call.1} parent=23 // pred_check
          %p203 = pneg %p44
        $region26: #{tpu_custom_call.1} parent=23 // pred_check_branch
          %205 = sbr.rel (%p203) target = $region28
        $region27: #{tpu_custom_call.1} parent=23 // pred_region
          %p206 = scmp.lt.s32.totalorder %s19, 1
          %s207 = scalar_select %p206, %s19, 1
          %s208 = smul.addr %s207, 4
          %s209 = smul.addr %s208, 8
          %s210 = scalar_lea.vmem %s0, %s209
        $region28: #{tpu_custom_call.1} parent=23 // pred_fallthru
          _
        // Predicated region
        $region29: #{tpu_custom_call.1} parent=23 // pred_check
          %p211 = pneg %p70
        $region30: #{tpu_custom_call.1} parent=23 // pred_check_branch
          %213 = sbr.rel (%p211) target = $region32
        $region31: #{tpu_custom_call.1} parent=23 // pred_region
          %p214 = scmp.lt.s32.totalorder %s19, 1
          %s215 = scalar_select %p214, %s19, 1
          %s216 = smul.addr %s215, 4
          %s217 = smul.addr %s216, 8
          %s218 = scalar_lea.vmem %s1, %s217
        $region32: #{tpu_custom_call.1} parent=23 // pred_fallthru
          _
        // Predicated region
        $region33: #{tpu_custom_call.1} parent=23 // pred_check
          %p219 = pneg %p145
        $region34: #{tpu_custom_call.1} parent=23 // pred_check_branch
          %221 = sbr.rel (%p219) target = $region36
        $region35: #{tpu_custom_call.1} parent=23 // pred_region
          %s222 = smul.u32 2, %s20
          %p223 = scmp.lt.s32.totalorder %s19, 1
          %s224 = scalar_select %p223, %s19, 1
          %p225 = scmp.lt.s32.totalorder %s222, 1
          %s226 = scalar_select %p225, %s222, 1
          %s227 = smul.addr %s224, 2
          %s228 = sadd.s32 %s226, %s227
          %s229 = smul.addr %s228, 8
          %s230 = scalar_lea.vmem %s4, %s229
          %s231 = smul.u32 2, %s20
        $region36: #{tpu_custom_call.1} parent=23 // pred_fallthru
          _
      $region24: #{tpu_custom_call.1} parent=5 // pred_fallthru
        _
      %p232 = scmp.le.s32.totalorder 1, %s12
      %p233 = scmp.lt.s32.totalorder %s12, 3
      %p234 = pnand %p232, %p233
      %p235 = pneg %p234
      // Predicated region
      $region37: #{tpu_custom_call.1} parent=5 // pred_check
        _
      $region38: #{tpu_custom_call.1} parent=5 // pred_check_branch
        %237 = sbr.rel (%p234) target = $region40
      $region39: #{tpu_custom_call.1} parent=5 // pred_region
        %s238 = ssub.s32 %s12, 1
        %p239 = scmp.lt.s32.totalorder %s21, 1
        %s240 = scalar_select %p239, %s21, 1
        %s241 = smul.addr %s240, 4
        %s242 = smul.addr %s241, 8
        %s243 = scalar_lea.vmem %s0, %s242
        %p244 = pneg %p50
        %p245 = pneg %p47
        %p246 = scmp.lt.s32.totalorder %s21, 1
        %s247 = scalar_select %p246, %s21, 1
        %s248 = smul.addr %s247, 4
        %s249 = smul.addr %s248, 8
        %s250 = scalar_lea.vmem %s1, %s249
        %p251 = pneg %p76
        %p252 = pneg %p73
        %s253 = smul.u32 2, %s22
        %p254 = scmp.lt.s32.totalorder %s253, 1
        %s255 = scalar_select %p254, %s253, 1
        %s256 = smul.addr %s255, 8
        %s257 = scalar_lea.vmem %s2, %s256
        %p258 = pneg %p102
        %p259 = pneg %p99
        %p260 = pneg %p123
        %p261 = pneg %p120
        %s262 = smul.u32 2, %s22
        %p263 = scmp.lt.s32.totalorder %s21, 1
        %s264 = scalar_select %p263, %s21, 1
        %p265 = scmp.lt.s32.totalorder %s262, 1
        %s266 = scalar_select %p265, %s262, 1
        %s267 = smul.addr %s264, 2
        %s268 = sadd.s32 %s266, %s267
        %s269 = smul.addr %s268, 8
        %s270 = scalar_lea.vmem %s4, %s269
        %p271 = pneg %p151
        %p272 = pneg %p148
        %p273 = pneg %p172
        %p274 = pneg %p169
        %p275 = scmp.lt.s32.totalorder %s21, 1
        %s276 = scalar_select %p275, %s21, 1
        %s277 = smul.addr %s276, 4
        %s278 = smul.addr %s277, 8
        %s279 = scalar_lea.vmem %s0, %s278
        %p280 = scmp.lt.s32.totalorder %s21, 1
        %s281 = scalar_select %p280, %s21, 1
        %s282 = smul.addr %s281, 4
        %s283 = smul.addr %s282, 8
        %s284 = scalar_lea.vmem %s1, %s283
        %s285 = smul.u32 2, %s22
        %p286 = scmp.lt.s32.totalorder %s285, 1
        %s287 = scalar_select %p286, %s285, 1
        %s288 = smul.addr %s287, 8
        %s289 = scalar_lea.vmem %s2, %s288
        %s290 = smul.u32 2, %s22
        %s291 = smul.u32 2, %s22
        %p292 = scmp.lt.s32.totalorder %s21, 1
        %s293 = scalar_select %p292, %s21, 1
        %p294 = scmp.lt.s32.totalorder %s291, 1
        %s295 = scalar_select %p294, %s291, 1
        %s296 = smul.addr %s293, 2
        %s297 = sadd.s32 %s295, %s296
        %s298 = smul.addr %s297, 8
        %s299 = scalar_lea.vmem %s4, %s298
        %s300 = smul.u32 2, %s22
        %p301 = scmp.eq.s32.totalorder %s21, 0
        %p302 = scmp.eq.s32.totalorder %s22, 0
        %p303 = pnand %p301, %p302
        %p304 = pneg %p303
        // Predicated region
        $region41: #{tpu_custom_call.1} parent=39 // pred_check
          _
        $region42: #{tpu_custom_call.1} parent=39 // pred_check_branch
          %306 = sbr.rel (%p303) target = $region44
        $region43: #{tpu_custom_call.1} parent=39 // pred_region
          %s307 = scalar_lea.smem [#allocation2], 0
          %308 = sst [smem:[%s307]] 0.0
          %s309 = scalar_lea.smem [#allocation2], 1
          %310 = sst [smem:[%s309]] 0.0
          %s311 = scalar_lea.smem [#allocation2], 2
          %312 = sst [smem:[%s311]] 0.0
        $region44: #{tpu_custom_call.1} parent=39 // pred_fallthru
          _
        %v313 = vld [vmem:[%s289] sm:$0xff]
        %v314 = vld [vmem:[%s289 + $0x8] sm:$0xff]
        %v315 = vld [vmem:[%s3] sm:$0xff]
        %v316 = vld [vmem:[%s3 + $0x8] sm:$0xff]
        %v317 = vld [vmem:[%s299] sm:$0xff]
        %v318 = vld [vmem:[%s299 + $0x8] sm:$0xff]
        %vm319 = vcmp.ne.s32.totalorder %v317, 4294967295
        %vm320 = vcmp.ne.s32.totalorder %v318, 4294967295
        %v321 = vsel %vm319, 1, 0
        %v322 = vsel %vm320, 1, 0
        %v323 = vcvt.s32.f32 %v321
        %v324 = vcvt.s32.f32 %v322
        %s325 = sld [smem:[#allocation2]]
        %v326 = vld [vmem:[%s279] sm:$0xff]
        %v327 = vld [vmem:[%s279 + $0x8] sm:$0xff]
        %v328 = vld [vmem:[%s279 + $0x10] sm:$0xff]
        %v329 = vld [vmem:[%s279 + $0x18] sm:$0xff]
        %vm330 = vcmask 64512
        %v332 = vsel %vm330, %v326, 0
        %v335 = vsel %vm330, %v327, 0
        %v338 = vsel %vm330, %v328, 0
        %v341 = vsel %vm330, %v329, 0
        %v344 = vsel %vm330, %v315, 0
        %v347 = vsel %vm330, %v316, 0
        %349 = vmatpush.xpose.msra.mxu0 0.0
        %350 = vmatpush.xpose.msra.mxu0 0.0
        %351 = vmatpush.xpose.msra.mxu0 0.0
        %352 = vmatpush.xpose.msra.mxu0 0.0
        %353 = vmatpush.xpose.msra.mxu0 0.0
        %354 = vmatpush.xpose.msra.mxu0 0.0
        %355 = vmatpush.xpose.msra.mxu0 0.0
        %356 = vmatpush.xpose.msra.mxu0 0.0
        %357 = vmatpush.xpose.msra.mxu0 0.0
        %358 = vmatpush.xpose.msra.mxu0 0.0
        %359 = vmatpush.xpose.msra.mxu0 0.0
        %360 = vmatpush.xpose.msra.mxu0 0.0
        %361 = vmatpush.xpose.msra.mxu0 0.0
        %362 = vmatpush.xpose.msra.mxu0 0.0
        %363 = vmatpush.xpose.msra.mxu0 %v347
        %364 = vmatpush.xpose.msra.mxu0 %v344
        %365 = vmatmul.f32.gmra.mxu0 %v332
        %v366 = vpop.f32.mrf.mxu0
        %v367 = vadd.f32 0.0, %v366
        %368 = vmatmul.f32.gmra.mxu0 %v335
        %v369 = vpop.f32.mrf.mxu0
        %v370 = vadd.f32 0.0, %v369
        %371 = vmatmul.f32.gmra.mxu0 %v338
        %v372 = vpop.f32.mrf.mxu0
        %v373 = vadd.f32 0.0, %v372
        %374 = vmatmul.f32.gmra.mxu0 %v341
        %v375 = vpop.f32.mrf.mxu0
        %v376 = vadd.f32 0.0, %v375
        %377 = vdwg.mxu0
        %v379 = vsel %vm330, %v313, 0
        %v382 = vsel %vm330, %v314, 0
        %384 = vmatpush.msra.mxu0 0.0
        %385 = vmatpush.msra.mxu0 0.0
        %386 = vmatpush.msra.mxu0 0.0
        %387 = vmatpush.msra.mxu0 0.0
        %388 = vmatpush.msra.mxu0 0.0
        %389 = vmatpush.msra.mxu0 0.0
        %390 = vmatpush.msra.mxu0 0.0
        %391 = vmatpush.msra.mxu0 0.0
        %392 = vmatpush.msra.mxu0 0.0
        %393 = vmatpush.msra.mxu0 0.0
        %394 = vmatpush.msra.mxu0 0.0
        %395 = vmatpush.msra.mxu0 0.0
        %396 = vmatpush.msra.mxu0 0.0
        %397 = vmatpush.msra.mxu0 0.0
        %398 = vmatpush.msra.mxu0 0.0
        %399 = vmatpush.msra.mxu0 %v367
        %400 = vmatmul.f32.gmra.mxu0 %v379
        %v401 = vpop.f32.mrf.mxu0
        %v402 = vadd.f32 0.0, %v401
        %403 = vmatmul.f32.gmra.mxu0 %v382
        %v404 = vpop.f32.mrf.mxu0
        %v405 = vadd.f32 0.0, %v404
        %406 = vdwg.mxu0
        %v407 = vsub.f32 -inf, %v402
        %v408 = vsub.f32 -inf, %v405
        %v409 = vmul.f32 %v407, 1.442695
        %v410 = vpow.pop %v409
        %v411 = vmul.f32 %v408, 1.442695
        %v412 = vpow.pop %v411
        %v413 = vmul.f32 %v410, 0.0
        %v414 = vmul.f32 %v412, 0.0
        %v415 = vsub.f32 %v402, %v402
        %v416 = vsub.f32 %v405, %v405
        %v417 = vmul.f32 %v415, 1.442695
        %v418 = vpow.pop %v417
        %v419 = vmul.f32 %v416, 1.442695
        %v420 = vpow.pop %v419
        %v421 = vadd.f32 %v413, %v418
        %v422 = vadd.f32 %v414, %v420
        %vm423 = vcmp.eq.s32.totalorder %v317, 0
        %vm424 = vcmp.eq.s32.totalorder %v318, 0
        %v425 = vsel %vm423, %v402, 0.0
        %v426 = vsel %vm424, %v405, 0.0
        %427 = vmatpush.msra.mxu0 0.0
        %428 = vmatpush.msra.mxu0 0.0
        %429 = vmatpush.msra.mxu0 0.0
        %430 = vmatpush.msra.mxu0 0.0
        %431 = vmatpush.msra.mxu0 0.0
        %432 = vmatpush.msra.mxu0 0.0
        %433 = vmatpush.msra.mxu0 0.0
        %434 = vmatpush.msra.mxu0 0.0
        %435 = vmatpush.msra.mxu0 0.0
        %436 = vmatpush.msra.mxu0 0.0
        %437 = vmatpush.msra.mxu0 0.0
        %438 = vmatpush.msra.mxu0 0.0
        %439 = vmatpush.msra.mxu0 0.0
        %440 = vmatpush.msra.mxu0 0.0
        %441 = vmatpush.msra.mxu0 0.0
        %442 = vmatpush.msra.mxu0 %v370
        %443 = vmatmul.f32.gmra.mxu0 %v379
        %v444 = vpop.f32.mrf.mxu0
        %v445 = vadd.f32 0.0, %v444
        %446 = vmatmul.f32.gmra.mxu0 %v382
        %v447 = vpop.f32.mrf.mxu0
        %v448 = vadd.f32 0.0, %v447
        %449 = vdwg.mxu0
        %v450 = vmax.f32 %v402, %v445
        %v451 = vmax.f32 %v405, %v448
        %v452 = vsub.f32 %v402, %v450
        %v453 = vsub.f32 %v405, %v451
        %v454 = vmul.f32 %v452, 1.442695
        %v455 = vpow.pop %v454
        %v456 = vmul.f32 %v453, 1.442695
        %v457 = vpow.pop %v456
        %v458 = vmul.f32 %v421, %v455
        %v459 = vmul.f32 %v422, %v457
        %v460 = vsub.f32 %v445, %v450
        %v461 = vsub.f32 %v448, %v451
        %v462 = vmul.f32 %v460, 1.442695
        %v463 = vpow.pop %v462
        %v464 = vmul.f32 %v461, 1.442695
        %v465 = vpow.pop %v464
        %v466 = vadd.f32 %v458, %v463
        %v467 = vadd.f32 %v459, %v465
        %vm468 = vcmp.eq.s32.totalorder %v317, 1
        %vm469 = vcmp.eq.s32.totalorder %v318, 1
        %v470 = vsel %vm468, %v445, %v425
        %v471 = vsel %vm469, %v448, %v426
        %472 = vmatpush.msra.mxu0 0.0
        %473 = vmatpush.msra.mxu0 0.0
        %474 = vmatpush.msra.mxu0 0.0
        %475 = vmatpush.msra.mxu0 0.0
        %476 = vmatpush.msra.mxu0 0.0
        %477 = vmatpush.msra.mxu0 0.0
        %478 = vmatpush.msra.mxu0 0.0
        %479 = vmatpush.msra.mxu0 0.0
        %480 = vmatpush.msra.mxu0 0.0
        %481 = vmatpush.msra.mxu0 0.0
        %482 = vmatpush.msra.mxu0 0.0
        %483 = vmatpush.msra.mxu0 0.0
        %484 = vmatpush.msra.mxu0 0.0
        %485 = vmatpush.msra.mxu0 0.0
        %486 = vmatpush.msra.mxu0 0.0
        %487 = vmatpush.msra.mxu0 %v373
        %488 = vmatmul.f32.gmra.mxu0 %v379
        %v489 = vpop.f32.mrf.mxu0
        %v490 = vadd.f32 0.0, %v489
        %491 = vmatmul.f32.gmra.mxu0 %v382
        %v492 = vpop.f32.mrf.mxu0
        %v493 = vadd.f32 0.0, %v492
        %494 = vdwg.mxu0
        %v495 = vmax.f32 %v450, %v490
        %v496 = vmax.f32 %v451, %v493
        %v497 = vsub.f32 %v450, %v495
        %v498 = vsub.f32 %v451, %v496
        %v499 = vmul.f32 %v497, 1.442695
        %v500 = vpow.pop %v499
        %v501 = vmul.f32 %v498, 1.442695
        %v502 = vpow.pop %v501
        %v503 = vmul.f32 %v466, %v500
        %v504 = vmul.f32 %v467, %v502
        %v505 = vsub.f32 %v490, %v495
        %v506 = vsub.f32 %v493, %v496
        %v507 = vmul.f32 %v505, 1.442695
        %v508 = vpow.pop %v507
        %v509 = vmul.f32 %v506, 1.442695
        %v510 = vpow.pop %v509
        %v511 = vadd.f32 %v503, %v508
        %v512 = vadd.f32 %v504, %v510
        %vm513 = vcmp.eq.s32.totalorder %v317, 2
        %vm514 = vcmp.eq.s32.totalorder %v318, 2
        %v515 = vsel %vm513, %v490, %v470
        %v516 = vsel %vm514, %v493, %v471
        %517 = vmatpush.msra.mxu0 0.0
        %518 = vmatpush.msra.mxu0 0.0
        %519 = vmatpush.msra.mxu0 0.0
        %520 = vmatpush.msra.mxu0 0.0
        %521 = vmatpush.msra.mxu0 0.0
        %522 = vmatpush.msra.mxu0 0.0
        %523 = vmatpush.msra.mxu0 0.0
        %524 = vmatpush.msra.mxu0 0.0
        %525 = vmatpush.msra.mxu0 0.0
        %526 = vmatpush.msra.mxu0 0.0
        %527 = vmatpush.msra.mxu0 0.0
        %528 = vmatpush.msra.mxu0 0.0
        %529 = vmatpush.msra.mxu0 0.0
        %530 = vmatpush.msra.mxu0 0.0
        %531 = vmatpush.msra.mxu0 0.0
        %532 = vmatpush.msra.mxu0 %v376
        %533 = vmatmul.f32.gmra.mxu0 %v379
        %v534 = vpop.f32.mrf.mxu0
        %v535 = vadd.f32 0.0, %v534
        %536 = vmatmul.f32.gmra.mxu0 %v382
        %v537 = vpop.f32.mrf.mxu0
        %v538 = vadd.f32 0.0, %v537
        %539 = vdwg.mxu0
        %v540 = vmax.f32 %v495, %v535
        %v541 = vmax.f32 %v496, %v538
        %v542 = vsub.f32 %v495, %v540
        %v543 = vsub.f32 %v496, %v541
        %v544 = vmul.f32 %v542, 1.442695
        %v545 = vpow.pop %v544
        %v546 = vmul.f32 %v543, 1.442695
        %v547 = vpow.pop %v546
        %v548 = vmul.f32 %v511, %v545
        %v549 = vmul.f32 %v512, %v547
        %v550 = vsub.f32 %v535, %v540
        %v551 = vsub.f32 %v538, %v541
        %v552 = vmul.f32 %v550, 1.442695
        %v553 = vpow.pop %v552
        %v554 = vmul.f32 %v551, 1.442695
        %v555 = vpow.pop %v554
        %v556 = vadd.f32 %v548, %v553
        %v557 = vadd.f32 %v549, %v555
        %vm558 = vcmp.eq.s32.totalorder %v317, 3
        %vm559 = vcmp.eq.s32.totalorder %v318, 3
        %v560 = vsel %vm558, %v535, %v515
        %v561 = vsel %vm559, %v538, %v516
        %v562 = vlog2.pop %v556
        %v563 = vmul.f32 %v562, 0.6931472
        %v564 = vlog2.pop %v557
        %v565 = vmul.f32 %v564, 0.6931472
        %v566 = vadd.f32 %v540, %v563
        %v567 = vadd.f32 %v541, %v565
        %v568 = vsub.f32 %v566, %v560
        %v569 = vsub.f32 %v567, %v561
        %v570 = vmul.f32 %v568, %v323
        %v571 = vmul.f32 %v569, %v324
        %vm572 = vcmask 130048
        %v573 = vsel %vm572, %v570, 0.0
        %v574 = vsel %vm572, %v571, 0.0
        %v575 = vadd.f32 %v573, %v574
        %576 = vadd.xlane.f32.xlu0 %v575
        %v577 = vpop.xlane.xlu0 %576
        %v578 = vrot.slane %v577, 4
        %v579 = vadd.f32 %v577, %v578
        %v580 = vrot.slane %v579, 2
        %v581 = vadd.f32 %v579, %v580
        %v582 = vrot.slane %v581, 1
        %v583 = vadd.f32 %v581, %v582
        %s584 = vtos %v583
        %s585 = sadd.f32 %s325, %s584
        %s586 = scalar_lea.smem [#allocation2], 0
        %587 = sst [smem:[%s586]] %s585
        %s588 = sld [smem:[#allocation2 + $0x1]]
        %v589 = vld [vmem:[%s284] sm:$0xff]
        %v590 = vld [vmem:[%s284 + $0x8] sm:$0xff]
        %v591 = vld [vmem:[%s284 + $0x10] sm:$0xff]
        %v592 = vld [vmem:[%s284 + $0x18] sm:$0xff]
        %v594 = vsel %vm330, %v589, 0
        %v597 = vsel %vm330, %v590, 0
        %v600 = vsel %vm330, %v591, 0
        %v603 = vsel %vm330, %v592, 0
        %605 = vmatpush.xpose.msra.mxu0 0.0
        %606 = vmatpush.xpose.msra.mxu0 0.0
        %607 = vmatpush.xpose.msra.mxu0 0.0
        %608 = vmatpush.xpose.msra.mxu0 0.0
        %609 = vmatpush.xpose.msra.mxu0 0.0
        %610 = vmatpush.xpose.msra.mxu0 0.0
        %611 = vmatpush.xpose.msra.mxu0 0.0
        %612 = vmatpush.xpose.msra.mxu0 0.0
        %613 = vmatpush.xpose.msra.mxu0 0.0
        %614 = vmatpush.xpose.msra.mxu0 0.0
        %615 = vmatpush.xpose.msra.mxu0 0.0
        %616 = vmatpush.xpose.msra.mxu0 0.0
        %617 = vmatpush.xpose.msra.mxu0 0.0
        %618 = vmatpush.xpose.msra.mxu0 0.0
        %619 = vmatpush.xpose.msra.mxu0 %v347
        %620 = vmatpush.xpose.msra.mxu0 %v344
        %621 = vmatmul.f32.gmra.mxu0 %v594
        %v622 = vpop.f32.mrf.mxu0
        %v623 = vadd.f32 0.0, %v622
        %624 = vmatmul.f32.gmra.mxu0 %v597
        %v625 = vpop.f32.mrf.mxu0
        %v626 = vadd.f32 0.0, %v625
        %627 = vmatmul.f32.gmra.mxu0 %v600
        %v628 = vpop.f32.mrf.mxu0
        %v629 = vadd.f32 0.0, %v628
        %630 = vmatmul.f32.gmra.mxu0 %v603
        %v631 = vpop.f32.mrf.mxu0
        %v632 = vadd.f32 0.0, %v631
        %633 = vdwg.mxu0
        %634 = vmatpush.msra.mxu0 0.0
        %635 = vmatpush.msra.mxu0 0.0
        %636 = vmatpush.msra.mxu0 0.0
        %637 = vmatpush.msra.mxu0 0.0
        %638 = vmatpush.msra.mxu0 0.0
        %639 = vmatpush.msra.mxu0 0.0
        %640 = vmatpush.msra.mxu0 0.0
        %641 = vmatpush.msra.mxu0 0.0
        %642 = vmatpush.msra.mxu0 0.0
        %643 = vmatpush.msra.mxu0 0.0
        %644 = vmatpush.msra.mxu0 0.0
        %645 = vmatpush.msra.mxu0 0.0
        %646 = vmatpush.msra.mxu0 0.0
        %647 = vmatpush.msra.mxu0 0.0
        %648 = vmatpush.msra.mxu0 0.0
        %649 = vmatpush.msra.mxu0 %v623
        %650 = vmatmul.f32.gmra.mxu0 %v379
        %v651 = vpop.f32.mrf.mxu0
        %v652 = vadd.f32 0.0, %v651
        %653 = vmatmul.f32.gmra.mxu0 %v382
        %v654 = vpop.f32.mrf.mxu0
        %v655 = vadd.f32 0.0, %v654
        %656 = vdwg.mxu0
        %v657 = vsub.f32 -inf, %v652
        %v658 = vsub.f32 -inf, %v655
        %v659 = vmul.f32 %v657, 1.442695
        %v660 = vpow.pop %v659
        %v661 = vmul.f32 %v658, 1.442695
        %v662 = vpow.pop %v661
        %v663 = vmul.f32 %v660, 0.0
        %v664 = vmul.f32 %v662, 0.0
        %v665 = vsub.f32 %v652, %v652
        %v666 = vsub.f32 %v655, %v655
        %v667 = vmul.f32 %v665, 1.442695
        %v668 = vpow.pop %v667
        %v669 = vmul.f32 %v666, 1.442695
        %v670 = vpow.pop %v669
        %v671 = vadd.f32 %v663, %v668
        %v672 = vadd.f32 %v664, %v670
        %v673 = vsel %vm423, %v652, 0.0
        %v674 = vsel %vm424, %v655, 0.0
        %675 = vmatpush.msra.mxu0 0.0
        %676 = vmatpush.msra.mxu0 0.0
        %677 = vmatpush.msra.mxu0 0.0
        %678 = vmatpush.msra.mxu0 0.0
        %679 = vmatpush.msra.mxu0 0.0
        %680 = vmatpush.msra.mxu0 0.0
        %681 = vmatpush.msra.mxu0 0.0
        %682 = vmatpush.msra.mxu0 0.0
        %683 = vmatpush.msra.mxu0 0.0
        %684 = vmatpush.msra.mxu0 0.0
        %685 = vmatpush.msra.mxu0 0.0
        %686 = vmatpush.msra.mxu0 0.0
        %687 = vmatpush.msra.mxu0 0.0
        %688 = vmatpush.msra.mxu0 0.0
        %689 = vmatpush.msra.mxu0 0.0
        %690 = vmatpush.msra.mxu0 %v626
        %691 = vmatmul.f32.gmra.mxu0 %v379
        %v692 = vpop.f32.mrf.mxu0
        %v693 = vadd.f32 0.0, %v692
        %694 = vmatmul.f32.gmra.mxu0 %v382
        %v695 = vpop.f32.mrf.mxu0
        %v696 = vadd.f32 0.0, %v695
        %697 = vdwg.mxu0
        %v698 = vmax.f32 %v652, %v693
        %v699 = vmax.f32 %v655, %v696
        %v700 = vsub.f32 %v652, %v698
        %v701 = vsub.f32 %v655, %v699
        %v702 = vmul.f32 %v700, 1.442695
        %v703 = vpow.pop %v702
        %v704 = vmul.f32 %v701, 1.442695
        %v705 = vpow.pop %v704
        %v706 = vmul.f32 %v671, %v703
        %v707 = vmul.f32 %v672, %v705
        %v708 = vsub.f32 %v693, %v698
        %v709 = vsub.f32 %v696, %v699
        %v710 = vmul.f32 %v708, 1.442695
        %v711 = vpow.pop %v710
        %v712 = vmul.f32 %v709, 1.442695
        %v713 = vpow.pop %v712
        %v714 = vadd.f32 %v706, %v711
        %v715 = vadd.f32 %v707, %v713
        %v716 = vsel %vm468, %v693, %v673
        %v717 = vsel %vm469, %v696, %v674
        %718 = vmatpush.msra.mxu0 0.0
        %719 = vmatpush.msra.mxu0 0.0
        %720 = vmatpush.msra.mxu0 0.0
        %721 = vmatpush.msra.mxu0 0.0
        %722 = vmatpush.msra.mxu0 0.0
        %723 = vmatpush.msra.mxu0 0.0
        %724 = vmatpush.msra.mxu0 0.0
        %725 = vmatpush.msra.mxu0 0.0
        %726 = vmatpush.msra.mxu0 0.0
        %727 = vmatpush.msra.mxu0 0.0
        %728 = vmatpush.msra.mxu0 0.0
        %729 = vmatpush.msra.mxu0 0.0
        %730 = vmatpush.msra.mxu0 0.0
        %731 = vmatpush.msra.mxu0 0.0
        %732 = vmatpush.msra.mxu0 0.0
        %733 = vmatpush.msra.mxu0 %v629
        %734 = vmatmul.f32.gmra.mxu0 %v379
        %v735 = vpop.f32.mrf.mxu0
        %v736 = vadd.f32 0.0, %v735
        %737 = vmatmul.f32.gmra.mxu0 %v382
        %v738 = vpop.f32.mrf.mxu0
        %v739 = vadd.f32 0.0, %v738
        %740 = vdwg.mxu0
        %v741 = vmax.f32 %v698, %v736
        %v742 = vmax.f32 %v699, %v739
        %v743 = vsub.f32 %v698, %v741
        %v744 = vsub.f32 %v699, %v742
        %v745 = vmul.f32 %v743, 1.442695
        %v746 = vpow.pop %v745
        %v747 = vmul.f32 %v744, 1.442695
        %v748 = vpow.pop %v747
        %v749 = vmul.f32 %v714, %v746
        %v750 = vmul.f32 %v715, %v748
        %v751 = vsub.f32 %v736, %v741
        %v752 = vsub.f32 %v739, %v742
        %v753 = vmul.f32 %v751, 1.442695
        %v754 = vpow.pop %v753
        %v755 = vmul.f32 %v752, 1.442695
        %v756 = vpow.pop %v755
        %v757 = vadd.f32 %v749, %v754
        %v758 = vadd.f32 %v750, %v756
        %v759 = vsel %vm513, %v736, %v716
        %v760 = vsel %vm514, %v739, %v717
        %761 = vmatpush.msra.mxu0 0.0
        %762 = vmatpush.msra.mxu0 0.0
        %763 = vmatpush.msra.mxu0 0.0
        %764 = vmatpush.msra.mxu0 0.0
        %765 = vmatpush.msra.mxu0 0.0
        %766 = vmatpush.msra.mxu0 0.0
        %767 = vmatpush.msra.mxu0 0.0
        %768 = vmatpush.msra.mxu0 0.0
        %769 = vmatpush.msra.mxu0 0.0
        %770 = vmatpush.msra.mxu0 0.0
        %771 = vmatpush.msra.mxu0 0.0
        %772 = vmatpush.msra.mxu0 0.0
        %773 = vmatpush.msra.mxu0 0.0
        %774 = vmatpush.msra.mxu0 0.0
        %775 = vmatpush.msra.mxu0 0.0
        %776 = vmatpush.msra.mxu0 %v632
        %777 = vmatmul.f32.gmra.mxu0 %v379
        %v778 = vpop.f32.mrf.mxu0
        %v779 = vadd.f32 0.0, %v778
        %780 = vmatmul.f32.gmra.mxu0 %v382
        %v781 = vpop.f32.mrf.mxu0
        %v782 = vadd.f32 0.0, %v781
        %783 = vdwg.mxu0
        %v784 = vmax.f32 %v741, %v779
        %v785 = vmax.f32 %v742, %v782
        %v786 = vsub.f32 %v741, %v784
        %v787 = vsub.f32 %v742, %v785
        %v788 = vmul.f32 %v786, 1.442695
        %v789 = vpow.pop %v788
        %v790 = vmul.f32 %v787, 1.442695
        %v791 = vpow.pop %v790
        %v792 = vmul.f32 %v757, %v789
        %v793 = vmul.f32 %v758, %v791
        %v794 = vsub.f32 %v779, %v784
        %v795 = vsub.f32 %v782, %v785
        %v796 = vmul.f32 %v794, 1.442695
        %v797 = vpow.pop %v796
        %v798 = vmul.f32 %v795, 1.442695
        %v799 = vpow.pop %v798
        %v800 = vadd.f32 %v792, %v797
        %v801 = vadd.f32 %v793, %v799
        %v802 = vsel %vm558, %v779, %v759
        %v803 = vsel %vm559, %v782, %v760
        %v804 = vlog2.pop %v800
        %v805 = vmul.f32 %v804, 0.6931472
        %v806 = vlog2.pop %v801
        %v807 = vmul.f32 %v806, 0.6931472
        %v808 = vadd.f32 %v784, %v805
        %v809 = vadd.f32 %v785, %v807
        %v810 = vsub.f32 %v808, %v802
        %v811 = vsub.f32 %v809, %v803
        %v812 = vmul.f32 %v810, %v323
        %v813 = vmul.f32 %v811, %v324
        %v814 = vsel %vm572, %v812, 0.0
        %v815 = vsel %vm572, %v813, 0.0
        %v816 = vadd.f32 %v814, %v815
        %817 = vadd.xlane.f32.xlu0 %v816
        %v818 = vpop.xlane.xlu0 %817
        %v819 = vrot.slane %v818, 4
        %v820 = vadd.f32 %v818, %v819
        %v821 = vrot.slane %v820, 2
        %v822 = vadd.f32 %v820, %v821
        %v823 = vrot.slane %v822, 1
        %v824 = vadd.f32 %v822, %v823
        %s825 = vtos %v824
        %s826 = sadd.f32 %s588, %s825
        %s827 = scalar_lea.smem [#allocation2], 1
        %828 = sst [smem:[%s827]] %s826
        %s829 = sld [smem:[#allocation2 + $0x2]]
        %v830 = vsel %vm572, %v323, 0.0
        %v831 = vsel %vm572, %v324, 0.0
        %v832 = vadd.f32 %v830, %v831
        %833 = vadd.xlane.f32.xlu0 %v832
        %v834 = vpop.xlane.xlu0 %833
        %v835 = vrot.slane %v834, 4
        %v836 = vadd.f32 %v834, %v835
        %v837 = vrot.slane %v836, 2
        %v838 = vadd.f32 %v836, %v837
        %v839 = vrot.slane %v838, 1
        %v840 = vadd.f32 %v838, %v839
        %s841 = vtos %v840
        %s842 = sadd.f32 %s829, %s841
        %s843 = scalar_lea.smem [#allocation2], 2
        %844 = sst [smem:[%s843]] %s842
        %s845 = sld [smem:[#allocation2]]
        %s846 = scalar_lea.smem [#allocation3], 0
        %847 = sst [smem:[%s846]] %s845
        %s848 = sld [smem:[#allocation2 + $0x1]]
        %s849 = scalar_lea.smem [#allocation3], 1
        %850 = sst [smem:[%s849]] %s848
        %s851 = sld [smem:[#allocation2 + $0x2]]
        %s852 = scalar_lea.smem [#allocation3], 2
        %853 = sst [smem:[%s852]] %s851
        // Predicated region
        $region45: #{tpu_custom_call.1} parent=39 // pred_check
          %p854 = pneg %p169
        $region46: #{tpu_custom_call.1} parent=39 // pred_check_branch
          %856 = sbr.rel (%p854) target = $region48
        $region47: #{tpu_custom_call.1} parent=39 // pred_region
          %858 = vsyncadd [#allocation4], 0
          %s860 = sshll.u32 %s5, 4
          %s861 = int_to_ptr.hbm [resolvable:$true] %s860
          %863 = dma.smem_to_hbm [#allocation3], 16, %s861, [#allocation4]
        $region48: #{tpu_custom_call.1} parent=39 // pred_fallthru
          _
        // Predicated region
        $region49: #{tpu_custom_call.1} parent=39 // pred_check
          %p864 = pneg %p169
        $region50: #{tpu_custom_call.1} parent=39 // pred_check_branch
          %866 = sbr.rel (%p864) target = $region52
        $region51: #{tpu_custom_call.1} parent=39 // pred_region
          %868 = dma.done [#allocation4], 16
        $region52: #{tpu_custom_call.1} parent=39 // pred_fallthru
          _
        %869 = sfence
      $region40: #{tpu_custom_call.1} parent=5 // pred_fallthru
        _
      %p870 = scmp.le.s32.totalorder 2, %s12
      // Predicated region
      $region53: #{tpu_custom_call.1} parent=5 // pred_check
        %p871 = pneg %p870
      $region54: #{tpu_custom_call.1} parent=5 // pred_check_branch
        %873 = sbr.rel (%p871) target = $region56
      $region55: #{tpu_custom_call.1} parent=5 // pred_region
        %s874 = ssub.s32 %s12, 2
      $region56: #{tpu_custom_call.1} parent=5 // pred_fallthru
        _
    $region6: #{tpu_custom_call.1} parent=1 // loop_footer
      %s16 = sadd.s32 1, %s12
    $region7: #{tpu_custom_call.1} parent=1 // loop_footer_branch
      %11 = sbr.rel target = $region3
    $region8: #{tpu_custom_call.1} parent=1 // loop_exit
      _
    %875 = vsyncpa [#allocation4], 1
    %s876 = scalar_lea.sflag [#allocation4], 1
    %877 = vsyncpa %s876, 1

</llo_original>
